<compile_context>
chip_gen: v5e
topology: v5e:2x2
jax: 0.10.0
libtpu: 0.0.40
codegen_flags: <defaults>
</compile_context>

<pallas_src>
import functools

import jax
import jax.numpy as jnp
from jax import lax
from jax.experimental import pallas as pl
from jax.experimental.pallas import tpu as pltpu

# ---- constants implied by the module definition -----------------------------
EEG_CH = 22      # spatial height consumed by the (22, 1) conv
C1 = 40          # shallow-net channel count
KW = 10          # temporal kernel width of the first conv
POOL_K = 3       # AvgPool2d kernel (time)
POOL_S = 15      # AvgPool2d stride (time)
BN_EPS = 1e-5


def _shallproj_kernel(x_ref, wf_ref, bf_ref, bn_s_ref, bn_b_ref, wp_ref, bp_ref,
                      o_ref, *, b_tile, w_pool, emb):
    # x block layout: (W_time, B_TILE, 22) -- time on the leading (tile) axis,
    # batch on sublanes, electrodes on lanes.
    x = x_ref[...]                    # (W, B, 22) f32
    wf = wf_ref[...]                  # (KW*22, 40)  fused conv1+conv2 weight
    bf = bf_ref[...]                  # (1, 40)      fused conv bias
    bn_s = bn_s_ref[...]              # (1, 40)      folded BN scale
    bn_b = bn_b_ref[...]              # (1, 40)      folded BN shift
    wp = wp_ref[...]                  # (40, E)      1x1 projection weight
    bp = bp_ref[...]                  # (1, E)

    n_rows = w_pool * POOL_K          # conv output rows actually read by the pool

    # im2col patch restricted to the conv rows the stride-15 pool consumes.
    # Row order: r = p*POOL_K + q  (time t = p*POOL_S + q); column index = k*22 + h.
    # Each tap k is gathered with leading-dim slices + one leading-dim concat
    # (no sublane relayout); the 10 taps are joined with a single lane concat.
    cols = []
    for k in range(KW):
        slab_k = jnp.concatenate(
            [x[p * POOL_S + k: p * POOL_S + k + POOL_K] for p in range(w_pool)],
            axis=0)                                        # (n_rows, B, 22)
        cols.append(slab_k.reshape(n_rows * b_tile, EEG_CH))
    patch = jnp.concatenate(cols, axis=-1)                 # (n_rows*B, KW*22)

    # Fused Conv2d(1->40,(1,10)) + Conv2d(40->40,(22,1)) as a single MXU matmul,
    # then BatchNorm (inference, folded affine) + SiLU.
    y = jnp.dot(patch, wf, preferred_element_type=jnp.float32) + bf   # (n_rows*B, 40)
    y = y * bn_s + bn_b
    y = y * jax.nn.sigmoid(y)
    y3 = y.reshape(n_rows, b_tile, C1)                     # (n_rows, B, 40)

    # AvgPool2d((1,3),(1,15)): rows were pre-selected, so pooling is a window mean
    # over q within each window p (static leading-dim indexing).
    pooled = jnp.concatenate(
        [sum(y3[POOL_K * p + q] for q in range(POOL_K))[None] for p in range(w_pool)],
        axis=0) * (1.0 / POOL_K)                           # (w_pool, B, 40)

    # TODO(synk): nn.Dropout is the identity in inference mode; no RNG applied.

    # projection_net: 1x1 conv over channels == matmul; Flatten handled by layout.
    proj = jnp.dot(pooled.reshape(w_pool * b_tile, C1), wp,
                   preferred_element_type=jnp.float32) + bp            # (w_pool*B, E)
    proj3 = proj.reshape(w_pool, b_tile, emb)
    # lane-dense (B, w_pool*E) output slab (unmasked full-width stores)
    out = jnp.concatenate([proj3[p] for p in range(w_pool)], axis=-1)
    o_ref[...] = out.astype(o_ref.dtype)


def shallproj_forward(x_nchw, params, *, b_tile=None):
    """Pallas implementation of ShallProjBlock.forward (inference mode)."""
    (w_conv1, b_conv1, w_conv2, b_conv2,
     bn_gamma, bn_beta, bn_mean, bn_var, w_proj, b_proj) = params

    n, c_in, h_in, w_in = x_nchw.shape
    assert c_in == 1 and h_in == EEG_CH, "module requires NCHW input with C=1, H=22"
    emb = w_proj.shape[0]
    w_out1 = w_in - KW + 1                           # after Conv2d(1,40,(1,10))
    w_pool = (w_out1 - POOL_K) // POOL_S + 1         # after AvgPool2d((1,3),(1,15))

    # ---- batch tiling: many samples per grid step (amortize pipeline overhead,
    #      fill the MXU M dimension); force a multiple of 8 for trivial reshapes.
    if b_tile is None:
        b_tile = min(256, ((n + 7) // 8) * 8)
    b_tile = max(8, ((b_tile + 7) // 8) * 8)
    n_pad = ((n + b_tile - 1) // b_tile) * b_tile

    # ---- glue: layout / parameter re-arrangement only --------------------------
    # time-major layout: (W, N, 22)
    x_t = jnp.transpose(x_nchw[:, 0], (2, 0, 1)).astype(jnp.float32)
    if n_pad != n:
        x_t = jnp.pad(x_t, ((0, 0), (0, n_pad - n), (0, 0)))

    # Fold conv1 into conv2:
    #   Wfused[k*22+h, co] = sum_c1 w1[c1,k] * w2[co,c1,h]
    #   bfused[co]        = sum_{c1,h} b1[c1] * w2[co,c1,h] + b2[co]
    w1m = w_conv1[:, 0, 0, :].astype(jnp.float32)                      # (40, 10) [c1,k]
    w2m = w_conv2[:, :, :, 0].astype(jnp.float32)                      # (40, 40, 22) [co,c1,h]
    wf = jnp.einsum('ck,och->kho', w1m, w2m).reshape(KW * EEG_CH, C1)  # (220, 40)
    bf = (jnp.einsum('c,och->o', b_conv1.astype(jnp.float32), w2m)
          + b_conv2.astype(jnp.float32)).reshape(1, C1)
    bn_scale_v = (bn_gamma / jnp.sqrt(bn_var + BN_EPS)).astype(jnp.float32)
    bn_shift_v = bn_beta.astype(jnp.float32) - bn_mean.astype(jnp.float32) * bn_scale_v
    bn_scale = bn_scale_v.reshape(1, C1)
    bn_shift = bn_shift_v.reshape(1, C1)
    wp = jnp.transpose(w_proj[:, :, 0, 0], (1, 0)).astype(jnp.float32)  # (40, E)
    bp = b_proj.astype(jnp.float32).reshape(1, emb)

    kernel = functools.partial(_shallproj_kernel,
                               b_tile=b_tile, w_pool=w_pool, emb=emb)

    out2d = pl.pallas_call(
        kernel,
        out_shape=jax.ShapeDtypeStruct((n_pad, w_pool * emb), jnp.float32),
        grid_spec=pltpu.PrefetchScalarGridSpec(
            num_scalar_prefetch=0,
            grid=(n_pad // b_tile,),
            in_specs=[
                pl.BlockSpec((w_in, b_tile, EEG_CH), lambda b: (0, b, 0)),  # x (batch tile)
                pl.BlockSpec((KW * EEG_CH, C1), lambda b: (0, 0)),          # fused conv W
                pl.BlockSpec((1, C1), lambda b: (0, 0)),                    # fused conv b
                pl.BlockSpec((1, C1), lambda b: (0, 0)),                    # BN scale
                pl.BlockSpec((1, C1), lambda b: (0, 0)),                    # BN shift
                pl.BlockSpec((C1, emb), lambda b: (0, 0)),                  # proj W
                pl.BlockSpec((1, emb), lambda b: (0, 0)),                   # proj b
            ],
            out_specs=pl.BlockSpec((b_tile, w_pool * emb), lambda b: (b, 0)),
        ),
        compiler_params=pltpu.CompilerParams(dimension_semantics=("parallel",)),
    )(x_t, wf, bf, bn_scale, bn_shift, wp, bp)

    # (N, w_pool*E) -> (N, w_pool, E) -> PyTorch's Flatten output (N, E, Wp).
    out = out2d[:n].reshape(n, w_pool, emb)
    return jnp.transpose(out, (0, 2, 1))


def ref_forward(x_nchw, params):
    """Pure-JAX reference mirroring the PyTorch forward (inference mode)."""
    (w_conv1, b_conv1, w_conv2, b_conv2,
     bn_gamma, bn_beta, bn_mean, bn_var, w_proj, b_proj) = params
    dn = ('NCHW', 'OIHW', 'NCHW')
    y = lax.conv_general_dilated(x_nchw, w_conv1, (1, 1), 'VALID', dimension_numbers=dn)
    y = y + b_conv1[None, :, None, None]
    y = lax.conv_general_dilated(y, w_conv2, (1, 1), 'VALID', dimension_numbers=dn)
    y = y + b_conv2[None, :, None, None]
    y = (y - bn_mean[None, :, None, None]) / jnp.sqrt(bn_var + BN_EPS)[None, :, None, None]
    y = y * bn_gamma[None, :, None, None] + bn_beta[None, :, None, None]
    y = y * jax.nn.sigmoid(y)
    y = lax.reduce_window(y, 0.0, lax.add, (1, 1, 1, POOL_K), (1, 1, 1, POOL_S), 'VALID')
    y = y / float(POOL_K)
    y = lax.conv_general_dilated(y, w_proj, (1, 1), 'VALID', dimension_numbers=dn)
    y = y + b_proj[None, :, None, None]
    return y.reshape(y.shape[0], y.shape[1], -1)


if __name__ == "__main__":
    N, W, E = 2, 64, 32   # batch=2, time=64, input_embedding_size=32

    key = jax.random.PRNGKey(0)
    ks = jax.random.split(key, 11)
    params = (
        0.10 * jax.random.normal(ks[0], (C1, 1, 1, KW), jnp.float32),        # conv1 weight
        0.10 * jax.random.normal(ks[1], (C1,), jnp.float32),                 # conv1 bias
        0.05 * jax.random.normal(ks[2], (C1, C1, EEG_CH, 1), jnp.float32),   # conv2 weight
        0.10 * jax.random.normal(ks[3], (C1,), jnp.float32),                 # conv2 bias
        1.00 + 0.10 * jax.random.normal(ks[4], (C1,), jnp.float32),          # BN gamma
        0.10 * jax.random.normal(ks[5], (C1,), jnp.float32),                 # BN beta
        0.10 * jax.random.normal(ks[6], (C1,), jnp.float32),                 # BN running_mean
        0.50 + jnp.abs(jax.random.normal(ks[7], (C1,), jnp.float32)),        # BN running_var
        0.10 * jax.random.normal(ks[8], (E, C1, 1, 1), jnp.float32),         # proj weight
        0.10 * jax.random.normal(ks[9], (E,), jnp.float32),                  # proj bias
    )
    x = jax.random.normal(ks[10], (N, 1, EEG_CH, W), jnp.float32)            # NCHW

    out = jax.block_until_ready(shallproj_forward(x, params))
    ref = jax.block_until_ready(ref_forward(x, params))

    w_pool = (W - KW + 1 - POOL_K) // POOL_S + 1
    assert out.shape == (N, E, w_pool), out.shape
    max_err = float(jnp.max(jnp.abs(out - ref)))
    if max_err < 1e-3:
        print("KERNEL_OK")
    else:
        print(f"MISMATCH max_abs_err={max_err}")
</pallas_src>

<mosaic_0001>
module attributes {stable_mosaic.version = 11 : i64} {
  func.func @_shallproj_kernel(%arg0: i32, %arg1: memref<64x8x22xf32, #tpu.memory_space<vmem>>, %arg2: memref<220x40xf32, #tpu.memory_space<vmem>>, %arg3: memref<1x40xf32, #tpu.memory_space<vmem>>, %arg4: memref<1x40xf32, #tpu.memory_space<vmem>>, %arg5: memref<1x40xf32, #tpu.memory_space<vmem>>, %arg6: memref<40x32xf32, #tpu.memory_space<vmem>>, %arg7: memref<1x32xf32, #tpu.memory_space<vmem>>, %arg8: memref<8x128xf32, #tpu.memory_space<vmem>>) attributes {dimension_semantics = [#tpu.dimension_semantics<parallel>], iteration_bounds = array<i64: 1>, scalar_prefetch = 0 : i64, scratch_operands = 0 : i64, tpu.core_type = #tpu.core_type<tc>, window_params = [{transform_indices = @transform_0, window_bounds = array<i64: 64, 8, 22>}, {pipeline_mode = #tpu.pipeline_mode<synchronous>, transform_indices = @transform_1, window_bounds = array<i64: 220, 40>}, {pipeline_mode = #tpu.pipeline_mode<synchronous>, transform_indices = @transform_2, window_bounds = array<i64: 1, 40>}, {pipeline_mode = #tpu.pipeline_mode<synchronous>, transform_indices = @transform_3, window_bounds = array<i64: 1, 40>}, {pipeline_mode = #tpu.pipeline_mode<synchronous>, transform_indices = @transform_4, window_bounds = array<i64: 1, 40>}, {pipeline_mode = #tpu.pipeline_mode<synchronous>, transform_indices = @transform_5, window_bounds = array<i64: 40, 32>}, {pipeline_mode = #tpu.pipeline_mode<synchronous>, transform_indices = @transform_6, window_bounds = array<i64: 1, 32>}, {transform_indices = @transform_7, window_bounds = array<i64: 8, 128>}]} {
    %c0 = arith.constant 0 : index
    %c0_0 = arith.constant 0 : index
    %c0_1 = arith.constant 0 : index
    %0 = vector.load %arg1[%c0, %c0_0, %c0_1] : memref<64x8x22xf32, #tpu.memory_space<vmem>>, vector<64x8x22xf32>
    %c0_2 = arith.constant 0 : index
    %c0_3 = arith.constant 0 : index
    %1 = vector.load %arg2[%c0_2, %c0_3] : memref<220x40xf32, #tpu.memory_space<vmem>>, vector<220x40xf32>
    %c0_4 = arith.constant 0 : index
    %c0_5 = arith.constant 0 : index
    %2 = vector.load %arg3[%c0_4, %c0_5] : memref<1x40xf32, #tpu.memory_space<vmem>>, vector<1x40xf32>
    %c0_6 = arith.constant 0 : index
    %c0_7 = arith.constant 0 : index
    %3 = vector.load %arg4[%c0_6, %c0_7] : memref<1x40xf32, #tpu.memory_space<vmem>>, vector<1x40xf32>
    %c0_8 = arith.constant 0 : index
    %c0_9 = arith.constant 0 : index
    %4 = vector.load %arg5[%c0_8, %c0_9] : memref<1x40xf32, #tpu.memory_space<vmem>>, vector<1x40xf32>
    %c0_10 = arith.constant 0 : index
    %c0_11 = arith.constant 0 : index
    %5 = vector.load %arg6[%c0_10, %c0_11] : memref<40x32xf32, #tpu.memory_space<vmem>>, vector<40x32xf32>
    %c0_12 = arith.constant 0 : index
    %c0_13 = arith.constant 0 : index
    %6 = vector.load %arg7[%c0_12, %c0_13] : memref<1x32xf32, #tpu.memory_space<vmem>>, vector<1x32xf32>
    %7 = vector.extract_strided_slice %0 {offsets = [0, 0, 0], sizes = [3, 8, 22], strides = [1, 1, 1]} : vector<64x8x22xf32> to vector<3x8x22xf32>
    %8 = vector.extract_strided_slice %0 {offsets = [15, 0, 0], sizes = [3, 8, 22], strides = [1, 1, 1]} : vector<64x8x22xf32> to vector<3x8x22xf32>
    %9 = vector.extract_strided_slice %0 {offsets = [30, 0, 0], sizes = [3, 8, 22], strides = [1, 1, 1]} : vector<64x8x22xf32> to vector<3x8x22xf32>
    %10 = vector.extract_strided_slice %0 {offsets = [45, 0, 0], sizes = [3, 8, 22], strides = [1, 1, 1]} : vector<64x8x22xf32> to vector<3x8x22xf32>
    %11 = tpu.concatenate %7, %8, %9, %10 in 0 : vector<3x8x22xf32>, vector<3x8x22xf32>, vector<3x8x22xf32>, vector<3x8x22xf32> -> vector<12x8x22xf32>
    %12 = vector.shape_cast %11 : vector<12x8x22xf32> to vector<96x22xf32>
    %13 = vector.extract_strided_slice %0 {offsets = [1, 0, 0], sizes = [3, 8, 22], strides = [1, 1, 1]} : vector<64x8x22xf32> to vector<3x8x22xf32>
    %14 = vector.extract_strided_slice %0 {offsets = [16, 0, 0], sizes = [3, 8, 22], strides = [1, 1, 1]} : vector<64x8x22xf32> to vector<3x8x22xf32>
    %15 = vector.extract_strided_slice %0 {offsets = [31, 0, 0], sizes = [3, 8, 22], strides = [1, 1, 1]} : vector<64x8x22xf32> to vector<3x8x22xf32>
    %16 = vector.extract_strided_slice %0 {offsets = [46, 0, 0], sizes = [3, 8, 22], strides = [1, 1, 1]} : vector<64x8x22xf32> to vector<3x8x22xf32>
    %17 = tpu.concatenate %13, %14, %15, %16 in 0 : vector<3x8x22xf32>, vector<3x8x22xf32>, vector<3x8x22xf32>, vector<3x8x22xf32> -> vector<12x8x22xf32>
    %18 = vector.shape_cast %17 : vector<12x8x22xf32> to vector<96x22xf32>
    %19 = vector.extract_strided_slice %0 {offsets = [2, 0, 0], sizes = [3, 8, 22], strides = [1, 1, 1]} : vector<64x8x22xf32> to vector<3x8x22xf32>
    %20 = vector.extract_strided_slice %0 {offsets = [17, 0, 0], sizes = [3, 8, 22], strides = [1, 1, 1]} : vector<64x8x22xf32> to vector<3x8x22xf32>
    %21 = vector.extract_strided_slice %0 {offsets = [32, 0, 0], sizes = [3, 8, 22], strides = [1, 1, 1]} : vector<64x8x22xf32> to vector<3x8x22xf32>
    %22 = vector.extract_strided_slice %0 {offsets = [47, 0, 0], sizes = [3, 8, 22], strides = [1, 1, 1]} : vector<64x8x22xf32> to vector<3x8x22xf32>
    %23 = tpu.concatenate %19, %20, %21, %22 in 0 : vector<3x8x22xf32>, vector<3x8x22xf32>, vector<3x8x22xf32>, vector<3x8x22xf32> -> vector<12x8x22xf32>
    %24 = vector.shape_cast %23 : vector<12x8x22xf32> to vector<96x22xf32>
    %25 = vector.extract_strided_slice %0 {offsets = [3, 0, 0], sizes = [3, 8, 22], strides = [1, 1, 1]} : vector<64x8x22xf32> to vector<3x8x22xf32>
    %26 = vector.extract_strided_slice %0 {offsets = [18, 0, 0], sizes = [3, 8, 22], strides = [1, 1, 1]} : vector<64x8x22xf32> to vector<3x8x22xf32>
    %27 = vector.extract_strided_slice %0 {offsets = [33, 0, 0], sizes = [3, 8, 22], strides = [1, 1, 1]} : vector<64x8x22xf32> to vector<3x8x22xf32>
    %28 = vector.extract_strided_slice %0 {offsets = [48, 0, 0], sizes = [3, 8, 22], strides = [1, 1, 1]} : vector<64x8x22xf32> to vector<3x8x22xf32>
    %29 = tpu.concatenate %25, %26, %27, %28 in 0 : vector<3x8x22xf32>, vector<3x8x22xf32>, vector<3x8x22xf32>, vector<3x8x22xf32> -> vector<12x8x22xf32>
    %30 = vector.shape_cast %29 : vector<12x8x22xf32> to vector<96x22xf32>
    %31 = vector.extract_strided_slice %0 {offsets = [4, 0, 0], sizes = [3, 8, 22], strides = [1, 1, 1]} : vector<64x8x22xf32> to vector<3x8x22xf32>
    %32 = vector.extract_strided_slice %0 {offsets = [19, 0, 0], sizes = [3, 8, 22], strides = [1, 1, 1]} : vector<64x8x22xf32> to vector<3x8x22xf32>
    %33 = vector.extract_strided_slice %0 {offsets = [34, 0, 0], sizes = [3, 8, 22], strides = [1, 1, 1]} : vector<64x8x22xf32> to vector<3x8x22xf32>
    %34 = vector.extract_strided_slice %0 {offsets = [49, 0, 0], sizes = [3, 8, 22], strides = [1, 1, 1]} : vector<64x8x22xf32> to vector<3x8x22xf32>
    %35 = tpu.concatenate %31, %32, %33, %34 in 0 : vector<3x8x22xf32>, vector<3x8x22xf32>, vector<3x8x22xf32>, vector<3x8x22xf32> -> vector<12x8x22xf32>
    %36 = vector.shape_cast %35 : vector<12x8x22xf32> to vector<96x22xf32>
    %37 = vector.extract_strided_slice %0 {offsets = [5, 0, 0], sizes = [3, 8, 22], strides = [1, 1, 1]} : vector<64x8x22xf32> to vector<3x8x22xf32>
    %38 = vector.extract_strided_slice %0 {offsets = [20, 0, 0], sizes = [3, 8, 22], strides = [1, 1, 1]} : vector<64x8x22xf32> to vector<3x8x22xf32>
    %39 = vector.extract_strided_slice %0 {offsets = [35, 0, 0], sizes = [3, 8, 22], strides = [1, 1, 1]} : vector<64x8x22xf32> to vector<3x8x22xf32>
    %40 = vector.extract_strided_slice %0 {offsets = [50, 0, 0], sizes = [3, 8, 22], strides = [1, 1, 1]} : vector<64x8x22xf32> to vector<3x8x22xf32>
    %41 = tpu.concatenate %37, %38, %39, %40 in 0 : vector<3x8x22xf32>, vector<3x8x22xf32>, vector<3x8x22xf32>, vector<3x8x22xf32> -> vector<12x8x22xf32>
    %42 = vector.shape_cast %41 : vector<12x8x22xf32> to vector<96x22xf32>
    %43 = vector.extract_strided_slice %0 {offsets = [6, 0, 0], sizes = [3, 8, 22], strides = [1, 1, 1]} : vector<64x8x22xf32> to vector<3x8x22xf32>
    %44 = vector.extract_strided_slice %0 {offsets = [21, 0, 0], sizes = [3, 8, 22], strides = [1, 1, 1]} : vector<64x8x22xf32> to vector<3x8x22xf32>
    %45 = vector.extract_strided_slice %0 {offsets = [36, 0, 0], sizes = [3, 8, 22], strides = [1, 1, 1]} : vector<64x8x22xf32> to vector<3x8x22xf32>
    %46 = vector.extract_strided_slice %0 {offsets = [51, 0, 0], sizes = [3, 8, 22], strides = [1, 1, 1]} : vector<64x8x22xf32> to vector<3x8x22xf32>
    %47 = tpu.concatenate %43, %44, %45, %46 in 0 : vector<3x8x22xf32>, vector<3x8x22xf32>, vector<3x8x22xf32>, vector<3x8x22xf32> -> vector<12x8x22xf32>
    %48 = vector.shape_cast %47 : vector<12x8x22xf32> to vector<96x22xf32>
    %49 = vector.extract_strided_slice %0 {offsets = [7, 0, 0], sizes = [3, 8, 22], strides = [1, 1, 1]} : vector<64x8x22xf32> to vector<3x8x22xf32>
    %50 = vector.extract_strided_slice %0 {offsets = [22, 0, 0], sizes = [3, 8, 22], strides = [1, 1, 1]} : vector<64x8x22xf32> to vector<3x8x22xf32>
    %51 = vector.extract_strided_slice %0 {offsets = [37, 0, 0], sizes = [3, 8, 22], strides = [1, 1, 1]} : vector<64x8x22xf32> to vector<3x8x22xf32>
    %52 = vector.extract_strided_slice %0 {offsets = [52, 0, 0], sizes = [3, 8, 22], strides = [1, 1, 1]} : vector<64x8x22xf32> to vector<3x8x22xf32>
    %53 = tpu.concatenate %49, %50, %51, %52 in 0 : vector<3x8x22xf32>, vector<3x8x22xf32>, vector<3x8x22xf32>, vector<3x8x22xf32> -> vector<12x8x22xf32>
    %54 = vector.shape_cast %53 : vector<12x8x22xf32> to vector<96x22xf32>
    %55 = vector.extract_strided_slice %0 {offsets = [8, 0, 0], sizes = [3, 8, 22], strides = [1, 1, 1]} : vector<64x8x22xf32> to vector<3x8x22xf32>
    %56 = vector.extract_strided_slice %0 {offsets = [23, 0, 0], sizes = [3, 8, 22], strides = [1, 1, 1]} : vector<64x8x22xf32> to vector<3x8x22xf32>
    %57 = vector.extract_strided_slice %0 {offsets = [38, 0, 0], sizes = [3, 8, 22], strides = [1, 1, 1]} : vector<64x8x22xf32> to vector<3x8x22xf32>
    %58 = vector.extract_strided_slice %0 {offsets = [53, 0, 0], sizes = [3, 8, 22], strides = [1, 1, 1]} : vector<64x8x22xf32> to vector<3x8x22xf32>
    %59 = tpu.concatenate %55, %56, %57, %58 in 0 : vector<3x8x22xf32>, vector<3x8x22xf32>, vector<3x8x22xf32>, vector<3x8x22xf32> -> vector<12x8x22xf32>
    %60 = vector.shape_cast %59 : vector<12x8x22xf32> to vector<96x22xf32>
    %61 = vector.extract_strided_slice %0 {offsets = [9, 0, 0], sizes = [3, 8, 22], strides = [1, 1, 1]} : vector<64x8x22xf32> to vector<3x8x22xf32>
    %62 = vector.extract_strided_slice %0 {offsets = [24, 0, 0], sizes = [3, 8, 22], strides = [1, 1, 1]} : vector<64x8x22xf32> to vector<3x8x22xf32>
    %63 = vector.extract_strided_slice %0 {offsets = [39, 0, 0], sizes = [3, 8, 22], strides = [1, 1, 1]} : vector<64x8x22xf32> to vector<3x8x22xf32>
    %64 = vector.extract_strided_slice %0 {offsets = [54, 0, 0], sizes = [3, 8, 22], strides = [1, 1, 1]} : vector<64x8x22xf32> to vector<3x8x22xf32>
    %65 = tpu.concatenate %61, %62, %63, %64 in 0 : vector<3x8x22xf32>, vector<3x8x22xf32>, vector<3x8x22xf32>, vector<3x8x22xf32> -> vector<12x8x22xf32>
    %66 = vector.shape_cast %65 : vector<12x8x22xf32> to vector<96x22xf32>
    %67 = tpu.concatenate %12, %18, %24, %30, %36, %42, %48, %54, %60, %66 in 1 : vector<96x22xf32>, vector<96x22xf32>, vector<96x22xf32>, vector<96x22xf32>, vector<96x22xf32>, vector<96x22xf32>, vector<96x22xf32>, vector<96x22xf32>, vector<96x22xf32>, vector<96x22xf32> -> vector<96x220xf32>
    %cst = arith.constant dense<0.000000e+00> : vector<96x40xf32>
    %68 = tpu.matmul %67, %1, %cst {dimension_numbers = #tpu.dot_dimension_numbers<[1], [0], [0], [1], [0, 0, 1, 1], [], []>} : vector<96x220xf32>, vector<220x40xf32>, vector<96x40xf32> -> vector<96x40xf32>
    %69 = vector.broadcast %2 : vector<1x40xf32> to vector<96x40xf32>
    %70 = arith.addf %68, %69 : vector<96x40xf32>
    %71 = vector.broadcast %3 : vector<1x40xf32> to vector<96x40xf32>
    %72 = arith.mulf %70, %71 : vector<96x40xf32>
    %73 = vector.broadcast %4 : vector<1x40xf32> to vector<96x40xf32>
    %74 = arith.addf %72, %73 : vector<96x40xf32>
    %75 = arith.negf %74 : vector<96x40xf32>
    %76 = math.exp %75 : vector<96x40xf32>
    %cst_14 = arith.constant 1.000000e+00 : f32
    %77 = vector.broadcast %cst_14 : f32 to vector<96x40xf32>
    %78 = arith.addf %77, %76 : vector<96x40xf32>
    %79 = arith.divf %77, %78 : vector<96x40xf32>
    %80 = arith.mulf %74, %79 : vector<96x40xf32>
    %81 = vector.shape_cast %80 : vector<96x40xf32> to vector<12x8x40xf32>
    %82 = vector.extract_strided_slice %81 {offsets = [0, 0, 0], sizes = [1, 8, 40], strides = [1, 1, 1]} : vector<12x8x40xf32> to vector<1x8x40xf32>
    %83 = vector.shape_cast %82 : vector<1x8x40xf32> to vector<8x40xf32>
    %cst_15 = arith.constant 0.000000e+00 : f32
    %84 = vector.broadcast %cst_15 : f32 to vector<8x40xf32>
    %85 = arith.addf %84, %83 : vector<8x40xf32>
    %86 = vector.extract_strided_slice %81 {offsets = [1, 0, 0], sizes = [1, 8, 40], strides = [1, 1, 1]} : vector<12x8x40xf32> to vector<1x8x40xf32>
    %87 = vector.shape_cast %86 : vector<1x8x40xf32> to vector<8x40xf32>
    %88 = arith.addf %85, %87 : vector<8x40xf32>
    %89 = vector.extract_strided_slice %81 {offsets = [2, 0, 0], sizes = [1, 8, 40], strides = [1, 1, 1]} : vector<12x8x40xf32> to vector<1x8x40xf32>
    %90 = vector.shape_cast %89 : vector<1x8x40xf32> to vector<8x40xf32>
    %91 = arith.addf %88, %90 : vector<8x40xf32>
    %92 = vector.shape_cast %91 : vector<8x40xf32> to vector<1x8x40xf32>
    %93 = vector.extract_strided_slice %81 {offsets = [3, 0, 0], sizes = [1, 8, 40], strides = [1, 1, 1]} : vector<12x8x40xf32> to vector<1x8x40xf32>
    %94 = vector.shape_cast %93 : vector<1x8x40xf32> to vector<8x40xf32>
    %cst_16 = arith.constant 0.000000e+00 : f32
    %95 = vector.broadcast %cst_16 : f32 to vector<8x40xf32>
    %96 = arith.addf %95, %94 : vector<8x40xf32>
    %97 = vector.extract_strided_slice %81 {offsets = [4, 0, 0], sizes = [1, 8, 40], strides = [1, 1, 1]} : vector<12x8x40xf32> to vector<1x8x40xf32>
    %98 = vector.shape_cast %97 : vector<1x8x40xf32> to vector<8x40xf32>
    %99 = arith.addf %96, %98 : vector<8x40xf32>
    %100 = vector.extract_strided_slice %81 {offsets = [5, 0, 0], sizes = [1, 8, 40], strides = [1, 1, 1]} : vector<12x8x40xf32> to vector<1x8x40xf32>
    %101 = vector.shape_cast %100 : vector<1x8x40xf32> to vector<8x40xf32>
    %102 = arith.addf %99, %101 : vector<8x40xf32>
    %103 = vector.shape_cast %102 : vector<8x40xf32> to vector<1x8x40xf32>
    %104 = vector.extract_strided_slice %81 {offsets = [6, 0, 0], sizes = [1, 8, 40], strides = [1, 1, 1]} : vector<12x8x40xf32> to vector<1x8x40xf32>
    %105 = vector.shape_cast %104 : vector<1x8x40xf32> to vector<8x40xf32>
    %cst_17 = arith.constant 0.000000e+00 : f32
    %106 = vector.broadcast %cst_17 : f32 to vector<8x40xf32>
    %107 = arith.addf %106, %105 : vector<8x40xf32>
    %108 = vector.extract_strided_slice %81 {offsets = [7, 0, 0], sizes = [1, 8, 40], strides = [1, 1, 1]} : vector<12x8x40xf32> to vector<1x8x40xf32>
    %109 = vector.shape_cast %108 : vector<1x8x40xf32> to vector<8x40xf32>
    %110 = arith.addf %107, %109 : vector<8x40xf32>
    %111 = vector.extract_strided_slice %81 {offsets = [8, 0, 0], sizes = [1, 8, 40], strides = [1, 1, 1]} : vector<12x8x40xf32> to vector<1x8x40xf32>
    %112 = vector.shape_cast %111 : vector<1x8x40xf32> to vector<8x40xf32>
    %113 = arith.addf %110, %112 : vector<8x40xf32>
    %114 = vector.shape_cast %113 : vector<8x40xf32> to vector<1x8x40xf32>
    %115 = vector.extract_strided_slice %81 {offsets = [9, 0, 0], sizes = [1, 8, 40], strides = [1, 1, 1]} : vector<12x8x40xf32> to vector<1x8x40xf32>
    %116 = vector.shape_cast %115 : vector<1x8x40xf32> to vector<8x40xf32>
    %cst_18 = arith.constant 0.000000e+00 : f32
    %117 = vector.broadcast %cst_18 : f32 to vector<8x40xf32>
    %118 = arith.addf %117, %116 : vector<8x40xf32>
    %119 = vector.extract_strided_slice %81 {offsets = [10, 0, 0], sizes = [1, 8, 40], strides = [1, 1, 1]} : vector<12x8x40xf32> to vector<1x8x40xf32>
    %120 = vector.shape_cast %119 : vector<1x8x40xf32> to vector<8x40xf32>
    %121 = arith.addf %118, %120 : vector<8x40xf32>
    %122 = vector.extract_strided_slice %81 {offsets = [11, 0, 0], sizes = [1, 8, 40], strides = [1, 1, 1]} : vector<12x8x40xf32> to vector<1x8x40xf32>
    %123 = vector.shape_cast %122 : vector<1x8x40xf32> to vector<8x40xf32>
    %124 = arith.addf %121, %123 : vector<8x40xf32>
    %125 = vector.shape_cast %124 : vector<8x40xf32> to vector<1x8x40xf32>
    %126 = tpu.concatenate %92, %103, %114, %125 in 0 : vector<1x8x40xf32>, vector<1x8x40xf32>, vector<1x8x40xf32>, vector<1x8x40xf32> -> vector<4x8x40xf32>
    %cst_19 = arith.constant 0.333333343 : f32
    %127 = vector.broadcast %cst_19 : f32 to vector<4x8x40xf32>
    %128 = arith.mulf %126, %127 : vector<4x8x40xf32>
    %129 = vector.shape_cast %128 : vector<4x8x40xf32> to vector<32x40xf32>
    %cst_20 = arith.constant dense<0.000000e+00> : vector<32x32xf32>
    %130 = tpu.matmul %129, %5, %cst_20 {dimension_numbers = #tpu.dot_dimension_numbers<[1], [0], [0], [1], [0, 0, 1, 1], [], []>} : vector<32x40xf32>, vector<40x32xf32>, vector<32x32xf32> -> vector<32x32xf32>
    %131 = vector.broadcast %6 : vector<1x32xf32> to vector<32x32xf32>
    %132 = arith.addf %130, %131 : vector<32x32xf32>
    %133 = vector.shape_cast %132 : vector<32x32xf32> to vector<4x8x32xf32>
    %134 = vector.extract_strided_slice %133 {offsets = [0, 0, 0], sizes = [1, 8, 32], strides = [1, 1, 1]} : vector<4x8x32xf32> to vector<1x8x32xf32>
    %135 = vector.shape_cast %134 : vector<1x8x32xf32> to vector<8x32xf32>
    %136 = vector.extract_strided_slice %133 {offsets = [1, 0, 0], sizes = [1, 8, 32], strides = [1, 1, 1]} : vector<4x8x32xf32> to vector<1x8x32xf32>
    %137 = vector.shape_cast %136 : vector<1x8x32xf32> to vector<8x32xf32>
    %138 = vector.extract_strided_slice %133 {offsets = [2, 0, 0], sizes = [1, 8, 32], strides = [1, 1, 1]} : vector<4x8x32xf32> to vector<1x8x32xf32>
    %139 = vector.shape_cast %138 : vector<1x8x32xf32> to vector<8x32xf32>
    %140 = vector.extract_strided_slice %133 {offsets = [3, 0, 0], sizes = [1, 8, 32], strides = [1, 1, 1]} : vector<4x8x32xf32> to vector<1x8x32xf32>
    %141 = vector.shape_cast %140 : vector<1x8x32xf32> to vector<8x32xf32>
    %142 = tpu.concatenate %135, %137, %139, %141 in 1 : vector<8x32xf32>, vector<8x32xf32>, vector<8x32xf32>, vector<8x32xf32> -> vector<8x128xf32>
    %c0_21 = arith.constant 0 : index
    %c0_22 = arith.constant 0 : index
    %143 = vector.load %arg8[%c0_21, %c0_22] : memref<8x128xf32, #tpu.memory_space<vmem>>, vector<8x128xf32>
    tpu.vector_store %arg8[%c0_21, %c0_22], %142 {strides = array<i32>} : memref<8x128xf32, #tpu.memory_space<vmem>>, vector<8x128xf32>,
    return
  }
  func.func @transform_0(%arg0: i32) -> (i32, i32, i32) {
    %c0_i32 = arith.constant 0 : i32
    %c0_i32_0 = arith.constant 0 : i32
    %c0_i32_1 = arith.constant 0 : i32
    return %c0_i32, %arg0, %c0_i32_0 : i32, i32, i32
  }
  func.func @transform_1(%arg0: i32) -> (i32, i32) {
    %c0_i32 = arith.constant 0 : i32
    %c0_i32_0 = arith.constant 0 : i32
    %c0_i32_1 = arith.constant 0 : i32
    return %c0_i32, %c0_i32_0 : i32, i32
  }
  func.func @transform_2(%arg0: i32) -> (i32, i32) {
    %c0_i32 = arith.constant 0 : i32
    %c0_i32_0 = arith.constant 0 : i32
    %c0_i32_1 = arith.constant 0 : i32
    return %c0_i32, %c0_i32_0 : i32, i32
  }
  func.func @transform_3(%arg0: i32) -> (i32, i32) {
    %c0_i32 = arith.constant 0 : i32
    %c0_i32_0 = arith.constant 0 : i32
    %c0_i32_1 = arith.constant 0 : i32
    return %c0_i32, %c0_i32_0 : i32, i32
  }
  func.func @transform_4(%arg0: i32) -> (i32, i32) {
    %c0_i32 = arith.constant 0 : i32
    %c0_i32_0 = arith.constant 0 : i32
    %c0_i32_1 = arith.constant 0 : i32
    return %c0_i32, %c0_i32_0 : i32, i32
  }
  func.func @transform_5(%arg0: i32) -> (i32, i32) {
    %c0_i32 = arith.constant 0 : i32
    %c0_i32_0 = arith.constant 0 : i32
    %c0_i32_1 = arith.constant 0 : i32
    return %c0_i32, %c0_i32_0 : i32, i32
  }
  func.func @transform_6(%arg0: i32) -> (i32, i32) {
    %c0_i32 = arith.constant 0 : i32
    %c0_i32_0 = arith.constant 0 : i32
    %c0_i32_1 = arith.constant 0 : i32
    return %c0_i32, %c0_i32_0 : i32, i32
  }
  func.func @transform_7(%arg0: i32) -> (i32, i32) {
    %c0_i32 = arith.constant 0 : i32
    %c0_i32_0 = arith.constant 0 : i32
    return %arg0, %c0_i32 : i32, i32
  }
}

</mosaic_0001>

<llo_original>
// kernel: tpu_custom_call.1
$region0: #{tpu_custom_call.1}
  #allocation0 [shape = 'u32[]', space=smem, size = 0x4, offset = 0x4, fixed_abs, tag = 'smem constant byte address 0x4 - core index']
  #allocation1 [shape = 'u32[72,128]{1,0:T(1,128)}', space=vmem, size = 0x9000, scoped, tag = 'internal scratch']
  %s0 = inlined_call_operand.vmem [shape: f32[64,8,22], index: 0, kind: input, shape index: {}]
  %s1 = inlined_call_operand.vmem [shape: f32[220,40], index: 1, kind: input, shape index: {}]
  %s2 = inlined_call_operand.vmem [shape: f32[1,40], index: 2, kind: input, shape index: {}]
  %s3 = inlined_call_operand.vmem [shape: f32[1,40], index: 3, kind: input, shape index: {}]
  %s4 = inlined_call_operand.vmem [shape: f32[1,40], index: 4, kind: input, shape index: {}]
  %s5 = inlined_call_operand.vmem [shape: f32[40,32], index: 5, kind: input, shape index: {}]
  %s6 = inlined_call_operand.vmem [shape: f32[1,32], index: 6, kind: input, shape index: {}]
  %s7 = inlined_call_operand.hbm [shape: f32[8,128], index: 7, kind: output, shape index: {}]
  %s8 = sld [smem:[#allocation0]]
  $region38: #{tpu_custom_call.1} parent=0
    _
  %s10 = ssub.s32 1, %s8
  %s11 = scalar_select 0, %s10, %s8
  $region1: #{tpu_custom_call.1} parent=0
    #allocation2 [shape = 'u8[4096]{0}', space=vmem, size = 0x1000, scoped, tag = 'output window, operand 0, single buffered']
    #allocation3 [shape = 's32[1]{0}', space=sflag, size = 0x4, scoped, tag = 'scoped memory for tpu_custom_call.1']
    %12 = vsyncpa [#allocation3], 0
    // Predicated region
    $region2: #{tpu_custom_call.1} parent=1 // pred_check
      _
    $region3: #{tpu_custom_call.1} parent=1 // pred_check_branch
      %14 = sbr.rel (0) target = $region5
    $region4: #{tpu_custom_call.1} parent=1 // pred_region
      _
    $region5: #{tpu_custom_call.1} parent=1 // pred_fallthru
      _
    // Predicated region
    $region6: #{tpu_custom_call.1} parent=1 // pred_check
      _
    $region7: #{tpu_custom_call.1} parent=1 // pred_check_branch
      %16 = sbr.rel (0) target = $region9
    $region8: #{tpu_custom_call.1} parent=1 // pred_region
      _
    $region9: #{tpu_custom_call.1} parent=1 // pred_fallthru
      _
    // Predicated region
    $region10: #{tpu_custom_call.1} parent=1 // pred_check
      _
    $region11: #{tpu_custom_call.1} parent=1 // pred_check_branch
      %18 = sbr.rel (0) target = $region13
    $region12: #{tpu_custom_call.1} parent=1 // pred_region
      _
    $region13: #{tpu_custom_call.1} parent=1 // pred_fallthru
      _
    // Predicated region
    $region14: #{tpu_custom_call.1} parent=1 // pred_check
      _
    $region15: #{tpu_custom_call.1} parent=1 // pred_check_branch
      %20 = sbr.rel (0) target = $region17
    $region16: #{tpu_custom_call.1} parent=1 // pred_region
      _
    $region17: #{tpu_custom_call.1} parent=1 // pred_fallthru
      _
    // Predicated region
    $region18: #{tpu_custom_call.1} parent=1 // pred_check
      _
    $region19: #{tpu_custom_call.1} parent=1 // pred_check_branch
      %22 = sbr.rel (0) target = $region21
    $region20: #{tpu_custom_call.1} parent=1 // pred_region
      _
    $region21: #{tpu_custom_call.1} parent=1 // pred_fallthru
      _
    // Predicated region
    $region22: #{tpu_custom_call.1} parent=1 // pred_check
      _
    $region23: #{tpu_custom_call.1} parent=1 // pred_check_branch
      %24 = sbr.rel (0) target = $region25
    $region24: #{tpu_custom_call.1} parent=1 // pred_region
      _
    $region25: #{tpu_custom_call.1} parent=1 // pred_fallthru
      _
    // Predicated region
    $region26: #{tpu_custom_call.1} parent=1 // pred_check
      _
    $region27: #{tpu_custom_call.1} parent=1 // pred_check_branch
      %26 = sbr.rel (0) target = $region29
    $region28: #{tpu_custom_call.1} parent=1 // pred_region
      _
    $region29: #{tpu_custom_call.1} parent=1 // pred_fallthru
      _
    %v27 = vld [vmem:[%s0] sm:$0xff]
    %v28 = vld [vmem:[%s0 + $0x8] sm:$0xff]
    %v29 = vld [vmem:[%s0 + $0x10] sm:$0xff]
    %v30 = vld [vmem:[%s0 + $0x18] sm:$0xff]
    %v31 = vld [vmem:[%s0 + $0x20] sm:$0xff]
    %v32 = vld [vmem:[%s0 + $0x28] sm:$0xff]
    %v33 = vld [vmem:[%s0 + $0x30] sm:$0xff]
    %v34 = vld [vmem:[%s0 + $0x38] sm:$0xff]
    %v35 = vld [vmem:[%s0 + $0x40] sm:$0xff]
    %v36 = vld [vmem:[%s0 + $0x48] sm:$0xff]
    %v37 = vld [vmem:[%s0 + $0x50] sm:$0xff]
    %v38 = vld [vmem:[%s0 + $0x58] sm:$0xff]
    %v39 = vld [vmem:[%s0 + $0x78] sm:$0xff]
    %v40 = vld [vmem:[%s0 + $0x80] sm:$0xff]
    %v41 = vld [vmem:[%s0 + $0x88] sm:$0xff]
    %v42 = vld [vmem:[%s0 + $0x90] sm:$0xff]
    %v43 = vld [vmem:[%s0 + $0x98] sm:$0xff]
    %v44 = vld [vmem:[%s0 + $0xa0] sm:$0xff]
    %v45 = vld [vmem:[%s0 + $0xa8] sm:$0xff]
    %v46 = vld [vmem:[%s0 + $0xb0] sm:$0xff]
    %v47 = vld [vmem:[%s0 + $0xb8] sm:$0xff]
    %v48 = vld [vmem:[%s0 + $0xc0] sm:$0xff]
    %v49 = vld [vmem:[%s0 + $0xc8] sm:$0xff]
    %v50 = vld [vmem:[%s0 + $0xd0] sm:$0xff]
    %v51 = vld [vmem:[%s0 + $0xf0] sm:$0xff]
    %v52 = vld [vmem:[%s0 + $0xf8] sm:$0xff]
    %v53 = vld [vmem:[%s0 + $0x100] sm:$0xff]
    %v54 = vld [vmem:[%s0 + $0x108] sm:$0xff]
    %v55 = vld [vmem:[%s0 + $0x110] sm:$0xff]
    %v56 = vld [vmem:[%s0 + $0x118] sm:$0xff]
    %v57 = vld [vmem:[%s0 + $0x120] sm:$0xff]
    %v58 = vld [vmem:[%s0 + $0x128] sm:$0xff]
    %v59 = vld [vmem:[%s0 + $0x130] sm:$0xff]
    %v60 = vld [vmem:[%s0 + $0x138] sm:$0xff]
    %v61 = vld [vmem:[%s0 + $0x140] sm:$0xff]
    %v62 = vld [vmem:[%s0 + $0x148] sm:$0xff]
    %v63 = vld [vmem:[%s0 + $0x168] sm:$0xff]
    %v64 = vld [vmem:[%s0 + $0x170] sm:$0xff]
    %v65 = vld [vmem:[%s0 + $0x178] sm:$0xff]
    %v66 = vld [vmem:[%s0 + $0x180] sm:$0xff]
    %v67 = vld [vmem:[%s0 + $0x188] sm:$0xff]
    %v68 = vld [vmem:[%s0 + $0x190] sm:$0xff]
    %v69 = vld [vmem:[%s0 + $0x198] sm:$0xff]
    %v70 = vld [vmem:[%s0 + $0x1a0] sm:$0xff]
    %v71 = vld [vmem:[%s0 + $0x1a8] sm:$0xff]
    %v72 = vld [vmem:[%s0 + $0x1b0] sm:$0xff]
    %v73 = vld [vmem:[%s0 + $0x1b8] sm:$0xff]
    %v74 = vld [vmem:[%s0 + $0x1c0] sm:$0xff]
    %v75 = vld [vmem:[%s1] sm:$0xff]
    %v76 = vld [vmem:[%s1 + $0x8] sm:$0xff]
    %v77 = vld [vmem:[%s1 + $0x10] sm:$0xff]
    %v78 = vld [vmem:[%s1 + $0x18] sm:$0xff]
    %v79 = vld [vmem:[%s1 + $0x20] sm:$0xff]
    %v80 = vld [vmem:[%s1 + $0x28] sm:$0xff]
    %v81 = vld [vmem:[%s1 + $0x30] sm:$0xff]
    %v82 = vld [vmem:[%s1 + $0x38] sm:$0xff]
    %v83 = vld [vmem:[%s1 + $0x40] sm:$0xff]
    %v84 = vld [vmem:[%s1 + $0x48] sm:$0xff]
    %v85 = vld [vmem:[%s1 + $0x50] sm:$0xff]
    %v86 = vld [vmem:[%s1 + $0x58] sm:$0xff]
    %v87 = vld [vmem:[%s1 + $0x60] sm:$0xff]
    %v88 = vld [vmem:[%s1 + $0x68] sm:$0xff]
    %v89 = vld [vmem:[%s1 + $0x70] sm:$0xff]
    %v90 = vld [vmem:[%s1 + $0x78] sm:$0xff]
    %v91 = vld [vmem:[%s1 + $0x80] sm:$0xff]
    %v92 = vld [vmem:[%s1 + $0x88] sm:$0xff]
    %v93 = vld [vmem:[%s1 + $0x90] sm:$0xff]
    %v94 = vld [vmem:[%s1 + $0x98] sm:$0xff]
    %v95 = vld [vmem:[%s1 + $0xa0] sm:$0xff]
    %v96 = vld [vmem:[%s1 + $0xa8] sm:$0xff]
    %v97 = vld [vmem:[%s1 + $0xb0] sm:$0xff]
    %v98 = vld [vmem:[%s1 + $0xb8] sm:$0xff]
    %v99 = vld [vmem:[%s1 + $0xc0] sm:$0xff]
    %v100 = vld [vmem:[%s1 + $0xc8] sm:$0xff]
    %v101 = vld [vmem:[%s1 + $0xd0] sm:$0xff]
    %v102 = vld [vmem:[%s1 + $0xd8] sm:$0xf]
    %v103 = vld [vmem:[%s2] sm:$0x1]
    %v104 = vld [vmem:[%s3] sm:$0x1]
    %v105 = vld [vmem:[%s4] sm:$0x1]
    %v106 = vld [vmem:[%s5] sm:$0xff]
    %v107 = vld [vmem:[%s5 + $0x8] sm:$0xff]
    %v108 = vld [vmem:[%s5 + $0x10] sm:$0xff]
    %v109 = vld [vmem:[%s5 + $0x18] sm:$0xff]
    %v110 = vld [vmem:[%s5 + $0x20] sm:$0xff]
    %v111 = vld [vmem:[%s6] sm:$0x1]
    %124 = vrot.lane.b32.xlu0 %v28, 22
    %v125 = vpop.permute.xlu0 %124
    %126 = vrot.lane.b32.xlu0 %v29, 22
    %v127 = vpop.permute.xlu0 %126
    %128 = vrot.lane.b32.xlu0 %v30, 22
    %v129 = vpop.permute.xlu0 %128
    %130 = vrot.lane.b32.xlu0 %v40, 22
    %v131 = vpop.permute.xlu0 %130
    %132 = vrot.lane.b32.xlu0 %v41, 22
    %v133 = vpop.permute.xlu0 %132
    %134 = vrot.lane.b32.xlu0 %v42, 22
    %v135 = vpop.permute.xlu0 %134
    %136 = vrot.lane.b32.xlu0 %v52, 22
    %v137 = vpop.permute.xlu0 %136
    %138 = vrot.lane.b32.xlu0 %v53, 22
    %v139 = vpop.permute.xlu0 %138
    %140 = vrot.lane.b32.xlu0 %v54, 22
    %v141 = vpop.permute.xlu0 %140
    %142 = vrot.lane.b32.xlu0 %v64, 22
    %v143 = vpop.permute.xlu0 %142
    %144 = vrot.lane.b32.xlu0 %v65, 22
    %v145 = vpop.permute.xlu0 %144
    %146 = vrot.lane.b32.xlu0 %v66, 22
    %v147 = vpop.permute.xlu0 %146
    %164 = vrot.lane.b32.xlu0 %v29, 44
    %v165 = vpop.permute.xlu0 %164
    %166 = vrot.lane.b32.xlu0 %v30, 44
    %v167 = vpop.permute.xlu0 %166
    %168 = vrot.lane.b32.xlu0 %v31, 44
    %v169 = vpop.permute.xlu0 %168
    %170 = vrot.lane.b32.xlu0 %v41, 44
    %v171 = vpop.permute.xlu0 %170
    %172 = vrot.lane.b32.xlu0 %v42, 44
    %v173 = vpop.permute.xlu0 %172
    %174 = vrot.lane.b32.xlu0 %v43, 44
    %v175 = vpop.permute.xlu0 %174
    %176 = vrot.lane.b32.xlu0 %v53, 44
    %v177 = vpop.permute.xlu0 %176
    %178 = vrot.lane.b32.xlu0 %v54, 44
    %v179 = vpop.permute.xlu0 %178
    %180 = vrot.lane.b32.xlu0 %v55, 44
    %v181 = vpop.permute.xlu0 %180
    %182 = vrot.lane.b32.xlu0 %v65, 44
    %v183 = vpop.permute.xlu0 %182
    %184 = vrot.lane.b32.xlu0 %v66, 44
    %v185 = vpop.permute.xlu0 %184
    %186 = vrot.lane.b32.xlu0 %v67, 44
    %v187 = vpop.permute.xlu0 %186
    %204 = vrot.lane.b32.xlu0 %v30, 66
    %v205 = vpop.permute.xlu0 %204
    %206 = vrot.lane.b32.xlu0 %v31, 66
    %v207 = vpop.permute.xlu0 %206
    %208 = vrot.lane.b32.xlu0 %v32, 66
    %v209 = vpop.permute.xlu0 %208
    %210 = vrot.lane.b32.xlu0 %v42, 66
    %v211 = vpop.permute.xlu0 %210
    %212 = vrot.lane.b32.xlu0 %v43, 66
    %v213 = vpop.permute.xlu0 %212
    %214 = vrot.lane.b32.xlu0 %v44, 66
    %v215 = vpop.permute.xlu0 %214
    %216 = vrot.lane.b32.xlu0 %v54, 66
    %v217 = vpop.permute.xlu0 %216
    %218 = vrot.lane.b32.xlu0 %v55, 66
    %v219 = vpop.permute.xlu0 %218
    %220 = vrot.lane.b32.xlu0 %v56, 66
    %v221 = vpop.permute.xlu0 %220
    %222 = vrot.lane.b32.xlu0 %v66, 66
    %v223 = vpop.permute.xlu0 %222
    %224 = vrot.lane.b32.xlu0 %v67, 66
    %v225 = vpop.permute.xlu0 %224
    %226 = vrot.lane.b32.xlu0 %v68, 66
    %v227 = vpop.permute.xlu0 %226
    %244 = vrot.lane.b32.xlu0 %v31, 88
    %v245 = vpop.permute.xlu0 %244
    %246 = vrot.lane.b32.xlu0 %v32, 88
    %v247 = vpop.permute.xlu0 %246
    %248 = vrot.lane.b32.xlu0 %v33, 88
    %v249 = vpop.permute.xlu0 %248
    %250 = vrot.lane.b32.xlu0 %v43, 88
    %v251 = vpop.permute.xlu0 %250
    %252 = vrot.lane.b32.xlu0 %v44, 88
    %v253 = vpop.permute.xlu0 %252
    %254 = vrot.lane.b32.xlu0 %v45, 88
    %v255 = vpop.permute.xlu0 %254
    %256 = vrot.lane.b32.xlu0 %v55, 88
    %v257 = vpop.permute.xlu0 %256
    %258 = vrot.lane.b32.xlu0 %v56, 88
    %v259 = vpop.permute.xlu0 %258
    %260 = vrot.lane.b32.xlu0 %v57, 88
    %v261 = vpop.permute.xlu0 %260
    %262 = vrot.lane.b32.xlu0 %v67, 88
    %v263 = vpop.permute.xlu0 %262
    %264 = vrot.lane.b32.xlu0 %v68, 88
    %v265 = vpop.permute.xlu0 %264
    %266 = vrot.lane.b32.xlu0 %v69, 88
    %v267 = vpop.permute.xlu0 %266
    %284 = vrot.lane.b32.xlu0 %v32, 110
    %v285 = vpop.permute.xlu0 %284
    %286 = vrot.lane.b32.xlu0 %v33, 110
    %v287 = vpop.permute.xlu0 %286
    %288 = vrot.lane.b32.xlu0 %v34, 110
    %v289 = vpop.permute.xlu0 %288
    %290 = vrot.lane.b32.xlu0 %v44, 110
    %v291 = vpop.permute.xlu0 %290
    %292 = vrot.lane.b32.xlu0 %v45, 110
    %v293 = vpop.permute.xlu0 %292
    %294 = vrot.lane.b32.xlu0 %v46, 110
    %v295 = vpop.permute.xlu0 %294
    %296 = vrot.lane.b32.xlu0 %v56, 110
    %v297 = vpop.permute.xlu0 %296
    %298 = vrot.lane.b32.xlu0 %v57, 110
    %v299 = vpop.permute.xlu0 %298
    %300 = vrot.lane.b32.xlu0 %v58, 110
    %v301 = vpop.permute.xlu0 %300
    %302 = vrot.lane.b32.xlu0 %v68, 110
    %v303 = vpop.permute.xlu0 %302
    %304 = vrot.lane.b32.xlu0 %v69, 110
    %v305 = vpop.permute.xlu0 %304
    %306 = vrot.lane.b32.xlu0 %v70, 110
    %v307 = vpop.permute.xlu0 %306
    %324 = vrot.lane.b32.xlu0 %v33, 4
    %v325 = vpop.permute.xlu0 %324
    %326 = vrot.lane.b32.xlu0 %v34, 4
    %v327 = vpop.permute.xlu0 %326
    %328 = vrot.lane.b32.xlu0 %v35, 4
    %v329 = vpop.permute.xlu0 %328
    %330 = vrot.lane.b32.xlu0 %v45, 4
    %v331 = vpop.permute.xlu0 %330
    %332 = vrot.lane.b32.xlu0 %v46, 4
    %v333 = vpop.permute.xlu0 %332
    %334 = vrot.lane.b32.xlu0 %v47, 4
    %v335 = vpop.permute.xlu0 %334
    %336 = vrot.lane.b32.xlu0 %v57, 4
    %v337 = vpop.permute.xlu0 %336
    %338 = vrot.lane.b32.xlu0 %v58, 4
    %v339 = vpop.permute.xlu0 %338
    %340 = vrot.lane.b32.xlu0 %v59, 4
    %v341 = vpop.permute.xlu0 %340
    %342 = vrot.lane.b32.xlu0 %v69, 4
    %v343 = vpop.permute.xlu0 %342
    %344 = vrot.lane.b32.xlu0 %v70, 4
    %v345 = vpop.permute.xlu0 %344
    %346 = vrot.lane.b32.xlu0 %v71, 4
    %v347 = vpop.permute.xlu0 %346
    %364 = vrot.lane.b32.xlu0 %v34, 26
    %v365 = vpop.permute.xlu0 %364
    %366 = vrot.lane.b32.xlu0 %v35, 26
    %v367 = vpop.permute.xlu0 %366
    %368 = vrot.lane.b32.xlu0 %v36, 26
    %v369 = vpop.permute.xlu0 %368
    %370 = vrot.lane.b32.xlu0 %v46, 26
    %v371 = vpop.permute.xlu0 %370
    %372 = vrot.lane.b32.xlu0 %v47, 26
    %v373 = vpop.permute.xlu0 %372
    %374 = vrot.lane.b32.xlu0 %v48, 26
    %v375 = vpop.permute.xlu0 %374
    %376 = vrot.lane.b32.xlu0 %v58, 26
    %v377 = vpop.permute.xlu0 %376
    %378 = vrot.lane.b32.xlu0 %v59, 26
    %v379 = vpop.permute.xlu0 %378
    %380 = vrot.lane.b32.xlu0 %v60, 26
    %v381 = vpop.permute.xlu0 %380
    %382 = vrot.lane.b32.xlu0 %v70, 26
    %v383 = vpop.permute.xlu0 %382
    %384 = vrot.lane.b32.xlu0 %v71, 26
    %v385 = vpop.permute.xlu0 %384
    %386 = vrot.lane.b32.xlu0 %v72, 26
    %v387 = vpop.permute.xlu0 %386
    %404 = vrot.lane.b32.xlu0 %v35, 48
    %v405 = vpop.permute.xlu0 %404
    %406 = vrot.lane.b32.xlu0 %v36, 48
    %v407 = vpop.permute.xlu0 %406
    %408 = vrot.lane.b32.xlu0 %v37, 48
    %v409 = vpop.permute.xlu0 %408
    %410 = vrot.lane.b32.xlu0 %v47, 48
    %v411 = vpop.permute.xlu0 %410
    %412 = vrot.lane.b32.xlu0 %v48, 48
    %v413 = vpop.permute.xlu0 %412
    %414 = vrot.lane.b32.xlu0 %v49, 48
    %v415 = vpop.permute.xlu0 %414
    %416 = vrot.lane.b32.xlu0 %v59, 48
    %v417 = vpop.permute.xlu0 %416
    %418 = vrot.lane.b32.xlu0 %v60, 48
    %v419 = vpop.permute.xlu0 %418
    %420 = vrot.lane.b32.xlu0 %v61, 48
    %v421 = vpop.permute.xlu0 %420
    %422 = vrot.lane.b32.xlu0 %v71, 48
    %v423 = vpop.permute.xlu0 %422
    %424 = vrot.lane.b32.xlu0 %v72, 48
    %v425 = vpop.permute.xlu0 %424
    %426 = vrot.lane.b32.xlu0 %v73, 48
    %v427 = vpop.permute.xlu0 %426
    %444 = vrot.lane.b32.xlu0 %v36, 70
    %v445 = vpop.permute.xlu0 %444
    %446 = vrot.lane.b32.xlu0 %v37, 70
    %v447 = vpop.permute.xlu0 %446
    %448 = vrot.lane.b32.xlu0 %v38, 70
    %v449 = vpop.permute.xlu0 %448
    %450 = vrot.lane.b32.xlu0 %v48, 70
    %v451 = vpop.permute.xlu0 %450
    %452 = vrot.lane.b32.xlu0 %v49, 70
    %v453 = vpop.permute.xlu0 %452
    %454 = vrot.lane.b32.xlu0 %v50, 70
    %v455 = vpop.permute.xlu0 %454
    %456 = vrot.lane.b32.xlu0 %v60, 70
    %v457 = vpop.permute.xlu0 %456
    %458 = vrot.lane.b32.xlu0 %v61, 70
    %v459 = vpop.permute.xlu0 %458
    %460 = vrot.lane.b32.xlu0 %v62, 70
    %v461 = vpop.permute.xlu0 %460
    %462 = vrot.lane.b32.xlu0 %v72, 70
    %v463 = vpop.permute.xlu0 %462
    %464 = vrot.lane.b32.xlu0 %v73, 70
    %v465 = vpop.permute.xlu0 %464
    %466 = vrot.lane.b32.xlu0 %v74, 70
    %v467 = vpop.permute.xlu0 %466
    %vm480 = vcmask 179200
    %v481 = vsel %vm480, %v27, %v125
    %v482 = vsel %vm480, %v28, %v127
    %v483 = vsel %vm480, %v29, %v129
    %v484 = vsel %vm480, %v39, %v131
    %v485 = vsel %vm480, %v40, %v133
    %v486 = vsel %vm480, %v41, %v135
    %v487 = vsel %vm480, %v51, %v137
    %v488 = vsel %vm480, %v52, %v139
    %v489 = vsel %vm480, %v53, %v141
    %v490 = vsel %vm480, %v63, %v143
    %v491 = vsel %vm480, %v64, %v145
    %v492 = vsel %vm480, %v65, %v147
    %vm493 = vcmask 359424
    %v494 = vsel %vm493, %v481, %v165
    %v495 = vsel %vm493, %v482, %v167
    %v496 = vsel %vm493, %v483, %v169
    %v497 = vsel %vm493, %v484, %v171
    %v498 = vsel %vm493, %v485, %v173
    %v499 = vsel %vm493, %v486, %v175
    %v500 = vsel %vm493, %v487, %v177
    %v501 = vsel %vm493, %v488, %v179
    %v502 = vsel %vm493, %v489, %v181
    %v503 = vsel %vm493, %v490, %v183
    %v504 = vsel %vm493, %v491, %v185
    %v505 = vsel %vm493, %v492, %v187
    %vm506 = vcmask 539648
    %v507 = vsel %vm506, %v494, %v205
    %v508 = vsel %vm506, %v495, %v207
    %v509 = vsel %vm506, %v496, %v209
    %v510 = vsel %vm506, %v497, %v211
    %v511 = vsel %vm506, %v498, %v213
    %v512 = vsel %vm506, %v499, %v215
    %v513 = vsel %vm506, %v500, %v217
    %v514 = vsel %vm506, %v501, %v219
    %v515 = vsel %vm506, %v502, %v221
    %v516 = vsel %vm506, %v503, %v223
    %v517 = vsel %vm506, %v504, %v225
    %v518 = vsel %vm506, %v505, %v227
    %vm519 = vcmask 719872
    %v520 = vsel %vm519, %v507, %v245
    %v521 = vsel %vm519, %v508, %v247
    %v522 = vsel %vm519, %v509, %v249
    %v523 = vsel %vm519, %v510, %v251
    %v524 = vsel %vm519, %v511, %v253
    %v525 = vsel %vm519, %v512, %v255
    %v526 = vsel %vm519, %v513, %v257
    %v527 = vsel %vm519, %v514, %v259
    %v528 = vsel %vm519, %v515, %v261
    %v529 = vsel %vm519, %v516, %v263
    %v530 = vsel %vm519, %v517, %v265
    %v531 = vsel %vm519, %v518, %v267
    %vm532 = vcmask 900096
    %v533 = vsel %vm532, %v520, %v285
    %v534 = vsel %vm532, %v521, %v287
    %v535 = vsel %vm532, %v522, %v289
    %v536 = vsel %vm532, %v523, %v291
    %v537 = vsel %vm532, %v524, %v293
    %v538 = vsel %vm532, %v525, %v295
    %v539 = vsel %vm532, %v526, %v297
    %v540 = vsel %vm532, %v527, %v299
    %v541 = vsel %vm532, %v528, %v301
    %v542 = vsel %vm532, %v529, %v303
    %v543 = vsel %vm532, %v530, %v305
    %v544 = vsel %vm532, %v531, %v307
    %vm545 = vcmask 31744
    %v546 = vsel %vm545, %v285, %v325
    %v547 = vsel %vm545, %v287, %v327
    %v548 = vsel %vm545, %v289, %v329
    %v549 = vsel %vm545, %v291, %v331
    %v550 = vsel %vm545, %v293, %v333
    %v551 = vsel %vm545, %v295, %v335
    %v552 = vsel %vm545, %v297, %v337
    %v553 = vsel %vm545, %v299, %v339
    %v554 = vsel %vm545, %v301, %v341
    %v555 = vsel %vm545, %v303, %v343
    %v556 = vsel %vm545, %v305, %v345
    %v557 = vsel %vm545, %v307, %v347
    %vm558 = vcmask 211968
    %v559 = vsel %vm558, %v546, %v365
    %v560 = vsel %vm558, %v547, %v367
    %v561 = vsel %vm558, %v548, %v369
    %v562 = vsel %vm558, %v549, %v371
    %v563 = vsel %vm558, %v550, %v373
    %v564 = vsel %vm558, %v551, %v375
    %v565 = vsel %vm558, %v552, %v377
    %v566 = vsel %vm558, %v553, %v379
    %v567 = vsel %vm558, %v554, %v381
    %v568 = vsel %vm558, %v555, %v383
    %v569 = vsel %vm558, %v556, %v385
    %v570 = vsel %vm558, %v557, %v387
    %vm571 = vcmask 392192
    %v572 = vsel %vm571, %v559, %v405
    %v573 = vsel %vm571, %v560, %v407
    %v574 = vsel %vm571, %v561, %v409
    %v575 = vsel %vm571, %v562, %v411
    %v576 = vsel %vm571, %v563, %v413
    %v577 = vsel %vm571, %v564, %v415
    %v578 = vsel %vm571, %v565, %v417
    %v579 = vsel %vm571, %v566, %v419
    %v580 = vsel %vm571, %v567, %v421
    %v581 = vsel %vm571, %v568, %v423
    %v582 = vsel %vm571, %v569, %v425
    %v583 = vsel %vm571, %v570, %v427
    %vm584 = vcmask 572416
    %v585 = vsel %vm584, %v572, %v445
    %v586 = vsel %vm584, %v573, %v447
    %v587 = vsel %vm584, %v574, %v449
    %v588 = vsel %vm584, %v575, %v451
    %v589 = vsel %vm584, %v576, %v453
    %v590 = vsel %vm584, %v577, %v455
    %v591 = vsel %vm584, %v578, %v457
    %v592 = vsel %vm584, %v579, %v459
    %v593 = vsel %vm584, %v580, %v461
    %v594 = vsel %vm584, %v581, %v463
    %v595 = vsel %vm584, %v582, %v465
    %v596 = vsel %vm584, %v583, %v467
    %v598 = vperm.slane %v103, 0
    %vm600 = vcmask 752640
    %v602 = vsel %vm600, %v585, 0
    %v605 = vsel %vm600, %v586, 0
    %v608 = vsel %vm600, %v587, 0
    %v611 = vsel %vm600, %v588, 0
    %v614 = vsel %vm600, %v589, 0
    %v617 = vsel %vm600, %v590, 0
    %v620 = vsel %vm600, %v591, 0
    %v623 = vsel %vm600, %v592, 0
    %v626 = vsel %vm600, %v593, 0
    %v629 = vsel %vm600, %v594, 0
    %v632 = vsel %vm600, %v595, 0
    %v635 = vsel %vm600, %v596, 0
    %vm637 = vcmask 1043456
    %v639 = vsel %vm637, %v102, 0
    %641 = vmatpush.msra.mxu0 %v90
    %642 = vmatpush.msra.mxu0 %v89
    %643 = vmatpush.msra.mxu0 %v88
    %644 = vmatpush.msra.mxu0 %v87
    %645 = vmatpush.msra.mxu0 %v86
    %646 = vmatpush.msra.mxu0 %v85
    %647 = vmatpush.msra.mxu0 %v84
    %648 = vmatpush.msra.mxu0 %v83
    %649 = vmatpush.msra.mxu0 %v82
    %650 = vmatpush.msra.mxu0 %v81
    %651 = vmatpush.msra.mxu0 %v80
    %652 = vmatpush.msra.mxu0 %v79
    %653 = vmatpush.msra.mxu0 %v78
    %654 = vmatpush.msra.mxu0 %v77
    %655 = vmatpush.msra.mxu0 %v76
    %656 = vmatpush.msra.mxu0 %v75
    %657 = vmatmul.f32.gmra.mxu0 %v533
    %v658 = vpop.f32.mrf.mxu0
    %v659 = vadd.f32 %v598, %v658
    %660 = vmatmul.f32.gmra.mxu0 %v534
    %v661 = vpop.f32.mrf.mxu0
    %v662 = vadd.f32 %v598, %v661
    %663 = vmatmul.f32.gmra.mxu0 %v535
    %v664 = vpop.f32.mrf.mxu0
    %v665 = vadd.f32 %v598, %v664
    %666 = vmatmul.f32.gmra.mxu0 %v536
    %v667 = vpop.f32.mrf.mxu0
    %v668 = vadd.f32 %v598, %v667
    %669 = vmatmul.f32.gmra.mxu0 %v537
    %v670 = vpop.f32.mrf.mxu0
    %v671 = vadd.f32 %v598, %v670
    %672 = vmatmul.f32.gmra.mxu0 %v538
    %v673 = vpop.f32.mrf.mxu0
    %v674 = vadd.f32 %v598, %v673
    %675 = vmatmul.f32.gmra.mxu0 %v539
    %v676 = vpop.f32.mrf.mxu0
    %v677 = vadd.f32 %v598, %v676
    %678 = vmatmul.f32.gmra.mxu0 %v540
    %v679 = vpop.f32.mrf.mxu0
    %v680 = vadd.f32 %v598, %v679
    %681 = vmatmul.f32.gmra.mxu0 %v541
    %v682 = vpop.f32.mrf.mxu0
    %v683 = vadd.f32 %v598, %v682
    %684 = vmatmul.f32.gmra.mxu0 %v542
    %v685 = vpop.f32.mrf.mxu0
    %v686 = vadd.f32 %v598, %v685
    %687 = vmatmul.f32.gmra.mxu0 %v543
    %v688 = vpop.f32.mrf.mxu0
    %v689 = vadd.f32 %v598, %v688
    %690 = vmatmul.f32.gmra.mxu0 %v544
    %v691 = vpop.f32.mrf.mxu0
    %v692 = vadd.f32 %v598, %v691
    %693 = vdwg.mxu0
    %694 = vmatpush.msra.mxu0 0.0
    %695 = vmatpush.msra.mxu0 0.0
    %696 = vmatpush.msra.mxu0 0.0
    %697 = vmatpush.msra.mxu0 0.0
    %698 = vmatpush.msra.mxu0 %v639
    %699 = vmatpush.msra.mxu0 %v101
    %700 = vmatpush.msra.mxu0 %v100
    %701 = vmatpush.msra.mxu0 %v99
    %702 = vmatpush.msra.mxu0 %v98
    %703 = vmatpush.msra.mxu0 %v97
    %704 = vmatpush.msra.mxu0 %v96
    %705 = vmatpush.msra.mxu0 %v95
    %706 = vmatpush.msra.mxu0 %v94
    %707 = vmatpush.msra.mxu0 %v93
    %708 = vmatpush.msra.mxu0 %v92
    %709 = vmatpush.msra.mxu0 %v91
    %710 = vmatmul.f32.gmra.mxu0 %v602
    %v711 = vpop.f32.mrf.mxu0
    %v712 = vadd.f32 %v659, %v711
    %713 = vmatmul.f32.gmra.mxu0 %v605
    %v714 = vpop.f32.mrf.mxu0
    %v715 = vadd.f32 %v662, %v714
    %716 = vmatmul.f32.gmra.mxu0 %v608
    %v717 = vpop.f32.mrf.mxu0
    %v718 = vadd.f32 %v665, %v717
    %719 = vmatmul.f32.gmra.mxu0 %v611
    %v720 = vpop.f32.mrf.mxu0
    %v721 = vadd.f32 %v668, %v720
    %722 = vmatmul.f32.gmra.mxu0 %v614
    %v723 = vpop.f32.mrf.mxu0
    %v724 = vadd.f32 %v671, %v723
    %725 = vmatmul.f32.gmra.mxu0 %v617
    %v726 = vpop.f32.mrf.mxu0
    %v727 = vadd.f32 %v674, %v726
    %728 = vmatmul.f32.gmra.mxu0 %v620
    %v729 = vpop.f32.mrf.mxu0
    %v730 = vadd.f32 %v677, %v729
    %731 = vmatmul.f32.gmra.mxu0 %v623
    %v732 = vpop.f32.mrf.mxu0
    %v733 = vadd.f32 %v680, %v732
    %734 = vmatmul.f32.gmra.mxu0 %v626
    %v735 = vpop.f32.mrf.mxu0
    %v736 = vadd.f32 %v683, %v735
    %737 = vmatmul.f32.gmra.mxu0 %v629
    %v738 = vpop.f32.mrf.mxu0
    %v739 = vadd.f32 %v686, %v738
    %740 = vmatmul.f32.gmra.mxu0 %v632
    %v741 = vpop.f32.mrf.mxu0
    %v742 = vadd.f32 %v689, %v741
    %743 = vmatmul.f32.gmra.mxu0 %v635
    %v744 = vpop.f32.mrf.mxu0
    %v745 = vadd.f32 %v692, %v744
    %746 = vdwg.mxu0
    %v748 = vperm.slane %v104, 0
    %v750 = vmul.f32 %v712, %v748
    %v751 = vmul.f32 %v715, %v748
    %v752 = vmul.f32 %v718, %v748
    %v753 = vmul.f32 %v721, %v748
    %v754 = vmul.f32 %v724, %v748
    %v755 = vmul.f32 %v727, %v748
    %v756 = vmul.f32 %v730, %v748
    %v757 = vmul.f32 %v733, %v748
    %v758 = vmul.f32 %v736, %v748
    %v759 = vmul.f32 %v739, %v748
    %v760 = vmul.f32 %v742, %v748
    %v761 = vmul.f32 %v745, %v748
    %v763 = vperm.slane %v105, 0
    %v765 = vadd.f32 %v750, %v763
    %v766 = vadd.f32 %v751, %v763
    %v767 = vadd.f32 %v752, %v763
    %v768 = vadd.f32 %v753, %v763
    %v769 = vadd.f32 %v754, %v763
    %v770 = vadd.f32 %v755, %v763
    %v771 = vadd.f32 %v756, %v763
    %v772 = vadd.f32 %v757, %v763
    %v773 = vadd.f32 %v758, %v763
    %v774 = vadd.f32 %v759, %v763
    %v775 = vadd.f32 %v760, %v763
    %v776 = vadd.f32 %v761, %v763
    %v777 = vxor.u32 %v765, 2147483648
    %v778 = vxor.u32 %v766, 2147483648
    %v779 = vxor.u32 %v767, 2147483648
    %v780 = vxor.u32 %v768, 2147483648
    %v781 = vxor.u32 %v769, 2147483648
    %v782 = vxor.u32 %v770, 2147483648
    %v783 = vxor.u32 %v771, 2147483648
    %v784 = vxor.u32 %v772, 2147483648
    %v785 = vxor.u32 %v773, 2147483648
    %v786 = vxor.u32 %v774, 2147483648
    %v787 = vxor.u32 %v775, 2147483648
    %v788 = vxor.u32 %v776, 2147483648
    %v789 = vmul.f32 %v777, 1.442695
    %v790 = vpow.pop %v789
    %v791 = vmul.f32 %v778, 1.442695
    %v792 = vpow.pop %v791
    %v793 = vmul.f32 %v779, 1.442695
    %v794 = vpow.pop %v793
    %v795 = vmul.f32 %v780, 1.442695
    %v796 = vpow.pop %v795
    %v797 = vmul.f32 %v781, 1.442695
    %v798 = vpow.pop %v797
    %v799 = vmul.f32 %v782, 1.442695
    %v800 = vpow.pop %v799
    %v801 = vmul.f32 %v783, 1.442695
    %v802 = vpow.pop %v801
    %v803 = vmul.f32 %v784, 1.442695
    %v804 = vpow.pop %v803
    %v805 = vmul.f32 %v785, 1.442695
    %v806 = vpow.pop %v805
    %v807 = vmul.f32 %v786, 1.442695
    %v808 = vpow.pop %v807
    %v809 = vmul.f32 %v787, 1.442695
    %v810 = vpow.pop %v809
    %v811 = vmul.f32 %v788, 1.442695
    %v812 = vpow.pop %v811
    %v813 = vadd.f32 %v790, 1.0
    %v814 = vadd.f32 %v792, 1.0
    %v815 = vadd.f32 %v794, 1.0
    %v816 = vadd.f32 %v796, 1.0
    %v817 = vadd.f32 %v798, 1.0
    %v818 = vadd.f32 %v800, 1.0
    %v819 = vadd.f32 %v802, 1.0
    %v820 = vadd.f32 %v804, 1.0
    %v821 = vadd.f32 %v806, 1.0
    %v822 = vadd.f32 %v808, 1.0
    %v823 = vadd.f32 %v810, 1.0
    %v824 = vadd.f32 %v812, 1.0
    %v825 = vrcp.pop %v813
    %v826 = vmul.f32 %v813, %v825
    %v827 = vsub.f32 1.0, %v826
    %v828 = vmul.f32 %v825, %v827
    %v829 = vadd.f32 %v825, %v828
    %vm830 = vweird.f32 %v813
    %vm831 = vweird.f32 %v825
    %vm832 = vmor %vm830, %vm831
    %v833 = vsel %vm832, %v825, %v829
    %v834 = vand.u32 2147483647, %v813
    %vm835 = vcmp.eq.f32.partialorder %v834, 8.507059e+37
    %v836 = vand.u32 %v813, 2147483648
    %v837 = vor.u32 1.1754944e-38, %v836
    %v838 = vsel %vm835, %v837, %v833
    %v839 = vmul.f32 1.0, %v838
    %v840 = vrcp.pop %v814
    %v841 = vmul.f32 %v814, %v840
    %v842 = vsub.f32 1.0, %v841
    %v843 = vmul.f32 %v840, %v842
    %v844 = vadd.f32 %v840, %v843
    %vm845 = vweird.f32 %v814
    %vm846 = vweird.f32 %v840
    %vm847 = vmor %vm845, %vm846
    %v848 = vsel %vm847, %v840, %v844
    %v849 = vand.u32 2147483647, %v814
    %vm850 = vcmp.eq.f32.partialorder %v849, 8.507059e+37
    %v851 = vand.u32 %v814, 2147483648
    %v852 = vor.u32 1.1754944e-38, %v851
    %v853 = vsel %vm850, %v852, %v848
    %v854 = vmul.f32 1.0, %v853
    %v855 = vrcp.pop %v815
    %v856 = vmul.f32 %v815, %v855
    %v857 = vsub.f32 1.0, %v856
    %v858 = vmul.f32 %v855, %v857
    %v859 = vadd.f32 %v855, %v858
    %vm860 = vweird.f32 %v815
    %vm861 = vweird.f32 %v855
    %vm862 = vmor %vm860, %vm861
    %v863 = vsel %vm862, %v855, %v859
    %v864 = vand.u32 2147483647, %v815
    %vm865 = vcmp.eq.f32.partialorder %v864, 8.507059e+37
    %v866 = vand.u32 %v815, 2147483648
    %v867 = vor.u32 1.1754944e-38, %v866
    %v868 = vsel %vm865, %v867, %v863
    %v869 = vmul.f32 1.0, %v868
    %v870 = vrcp.pop %v816
    %v871 = vmul.f32 %v816, %v870
    %v872 = vsub.f32 1.0, %v871
    %v873 = vmul.f32 %v870, %v872
    %v874 = vadd.f32 %v870, %v873
    %vm875 = vweird.f32 %v816
    %vm876 = vweird.f32 %v870
    %vm877 = vmor %vm875, %vm876
    %v878 = vsel %vm877, %v870, %v874
    %v879 = vand.u32 2147483647, %v816
    %vm880 = vcmp.eq.f32.partialorder %v879, 8.507059e+37
    %v881 = vand.u32 %v816, 2147483648
    %v882 = vor.u32 1.1754944e-38, %v881
    %v883 = vsel %vm880, %v882, %v878
    %v884 = vmul.f32 1.0, %v883
    %v885 = vrcp.pop %v817
    %v886 = vmul.f32 %v817, %v885
    %v887 = vsub.f32 1.0, %v886
    %v888 = vmul.f32 %v885, %v887
    %v889 = vadd.f32 %v885, %v888
    %vm890 = vweird.f32 %v817
    %vm891 = vweird.f32 %v885
    %vm892 = vmor %vm890, %vm891
    %v893 = vsel %vm892, %v885, %v889
    %v894 = vand.u32 2147483647, %v817
    %vm895 = vcmp.eq.f32.partialorder %v894, 8.507059e+37
    %v896 = vand.u32 %v817, 2147483648
    %v897 = vor.u32 1.1754944e-38, %v896
    %v898 = vsel %vm895, %v897, %v893
    %v899 = vmul.f32 1.0, %v898
    %v900 = vrcp.pop %v818
    %v901 = vmul.f32 %v818, %v900
    %v902 = vsub.f32 1.0, %v901
    %v903 = vmul.f32 %v900, %v902
    %v904 = vadd.f32 %v900, %v903
    %vm905 = vweird.f32 %v818
    %vm906 = vweird.f32 %v900
    %vm907 = vmor %vm905, %vm906
    %v908 = vsel %vm907, %v900, %v904
    %v909 = vand.u32 2147483647, %v818
    %vm910 = vcmp.eq.f32.partialorder %v909, 8.507059e+37
    %v911 = vand.u32 %v818, 2147483648
    %v912 = vor.u32 1.1754944e-38, %v911
    %v913 = vsel %vm910, %v912, %v908
    %v914 = vmul.f32 1.0, %v913
    %v915 = vrcp.pop %v819
    %v916 = vmul.f32 %v819, %v915
    %v917 = vsub.f32 1.0, %v916
    %v918 = vmul.f32 %v915, %v917
    %v919 = vadd.f32 %v915, %v918
    %vm920 = vweird.f32 %v819
    %vm921 = vweird.f32 %v915
    %vm922 = vmor %vm920, %vm921
    %v923 = vsel %vm922, %v915, %v919
    %v924 = vand.u32 2147483647, %v819
    %vm925 = vcmp.eq.f32.partialorder %v924, 8.507059e+37
    %v926 = vand.u32 %v819, 2147483648
    %v927 = vor.u32 1.1754944e-38, %v926
    %v928 = vsel %vm925, %v927, %v923
    %v929 = vmul.f32 1.0, %v928
    %v930 = vrcp.pop %v820
    %v931 = vmul.f32 %v820, %v930
    %v932 = vsub.f32 1.0, %v931
    %v933 = vmul.f32 %v930, %v932
    %v934 = vadd.f32 %v930, %v933
    %vm935 = vweird.f32 %v820
    %vm936 = vweird.f32 %v930
    %vm937 = vmor %vm935, %vm936
    %v938 = vsel %vm937, %v930, %v934
    %v939 = vand.u32 2147483647, %v820
    %vm940 = vcmp.eq.f32.partialorder %v939, 8.507059e+37
    %v941 = vand.u32 %v820, 2147483648
    %v942 = vor.u32 1.1754944e-38, %v941
    %v943 = vsel %vm940, %v942, %v938
    %v944 = vmul.f32 1.0, %v943
    %v945 = vrcp.pop %v821
    %v946 = vmul.f32 %v821, %v945
    %v947 = vsub.f32 1.0, %v946
    %v948 = vmul.f32 %v945, %v947
    %v949 = vadd.f32 %v945, %v948
    %vm950 = vweird.f32 %v821
    %vm951 = vweird.f32 %v945
    %vm952 = vmor %vm950, %vm951
    %v953 = vsel %vm952, %v945, %v949
    %v954 = vand.u32 2147483647, %v821
    %vm955 = vcmp.eq.f32.partialorder %v954, 8.507059e+37
    %v956 = vand.u32 %v821, 2147483648
    %v957 = vor.u32 1.1754944e-38, %v956
    %v958 = vsel %vm955, %v957, %v953
    %v959 = vmul.f32 1.0, %v958
    %v960 = vrcp.pop %v822
    %v961 = vmul.f32 %v822, %v960
    %v962 = vsub.f32 1.0, %v961
    %v963 = vmul.f32 %v960, %v962
    %v964 = vadd.f32 %v960, %v963
    %vm965 = vweird.f32 %v822
    %vm966 = vweird.f32 %v960
    %vm967 = vmor %vm965, %vm966
    %v968 = vsel %vm967, %v960, %v964
    %v969 = vand.u32 2147483647, %v822
    %vm970 = vcmp.eq.f32.partialorder %v969, 8.507059e+37
    %v971 = vand.u32 %v822, 2147483648
    %v972 = vor.u32 1.1754944e-38, %v971
    %v973 = vsel %vm970, %v972, %v968
    %v974 = vmul.f32 1.0, %v973
    %v975 = vrcp.pop %v823
    %v976 = vmul.f32 %v823, %v975
    %v977 = vsub.f32 1.0, %v976
    %v978 = vmul.f32 %v975, %v977
    %v979 = vadd.f32 %v975, %v978
    %vm980 = vweird.f32 %v823
    %vm981 = vweird.f32 %v975
    %vm982 = vmor %vm980, %vm981
    %v983 = vsel %vm982, %v975, %v979
    %v984 = vand.u32 2147483647, %v823
    %vm985 = vcmp.eq.f32.partialorder %v984, 8.507059e+37
    %v986 = vand.u32 %v823, 2147483648
    %v987 = vor.u32 1.1754944e-38, %v986
    %v988 = vsel %vm985, %v987, %v983
    %v989 = vmul.f32 1.0, %v988
    %v990 = vrcp.pop %v824
    %v991 = vmul.f32 %v824, %v990
    %v992 = vsub.f32 1.0, %v991
    %v993 = vmul.f32 %v990, %v992
    %v994 = vadd.f32 %v990, %v993
    %vm995 = vweird.f32 %v824
    %vm996 = vweird.f32 %v990
    %vm997 = vmor %vm995, %vm996
    %v998 = vsel %vm997, %v990, %v994
    %v999 = vand.u32 2147483647, %v824
    %vm1000 = vcmp.eq.f32.partialorder %v999, 8.507059e+37
    %v1001 = vand.u32 %v824, 2147483648
    %v1002 = vor.u32 1.1754944e-38, %v1001
    %v1003 = vsel %vm1000, %v1002, %v998
    %v1004 = vmul.f32 1.0, %v1003
    %v1005 = vmul.f32 %v765, %v839
    %v1006 = vmul.f32 %v766, %v854
    %v1007 = vmul.f32 %v767, %v869
    %v1008 = vmul.f32 %v768, %v884
    %v1009 = vmul.f32 %v769, %v899
    %v1010 = vmul.f32 %v770, %v914
    %v1011 = vmul.f32 %v771, %v929
    %v1012 = vmul.f32 %v772, %v944
    %v1013 = vmul.f32 %v773, %v959
    %v1014 = vmul.f32 %v774, %v974
    %v1015 = vmul.f32 %v775, %v989
    %v1016 = vmul.f32 %v776, %v1004
    %v1017 = vadd.f32 %v1005, 0.0
    %v1018 = vadd.f32 %v1017, %v1006
    %v1019 = vadd.f32 %v1018, %v1007
    %v1020 = vadd.f32 %v1008, 0.0
    %v1021 = vadd.f32 %v1020, %v1009
    %v1022 = vadd.f32 %v1021, %v1010
    %v1023 = vadd.f32 %v1011, 0.0
    %v1024 = vadd.f32 %v1023, %v1012
    %v1025 = vadd.f32 %v1024, %v1013
    %v1026 = vadd.f32 %v1014, 0.0
    %v1027 = vadd.f32 %v1026, %v1015
    %v1028 = vadd.f32 %v1027, %v1016
    %v1029 = vmul.f32 %v1019, 0.33333334
    %v1030 = vmul.f32 %v1022, 0.33333334
    %v1031 = vmul.f32 %v1025, 0.33333334
    %v1032 = vmul.f32 %v1028, 0.33333334
    %v1034 = vperm.slane %v111, 0
    %vm1036 = vcmask 326656
    %v1038 = vsel %vm1036, %v1029, 0
    %v1041 = vsel %vm1036, %v1030, 0
    %v1044 = vsel %vm1036, %v1031, 0
    %v1047 = vsel %vm1036, %v1032, 0
    %1049 = vmatpush.msra.mxu0 0.0
    %1050 = vmatpush.msra.mxu0 0.0
    %1051 = vmatpush.msra.mxu0 0.0
    %1052 = vmatpush.msra.mxu0 0.0
    %1053 = vmatpush.msra.mxu0 0.0
    %1054 = vmatpush.msra.mxu0 0.0
    %1055 = vmatpush.msra.mxu0 0.0
    %1056 = vmatpush.msra.mxu0 0.0
    %1057 = vmatpush.msra.mxu0 0.0
    %1058 = vmatpush.msra.mxu0 0.0
    %1059 = vmatpush.msra.mxu0 0.0
    %1060 = vmatpush.msra.mxu0 %v110
    %1061 = vmatpush.msra.mxu0 %v109
    %1062 = vmatpush.msra.mxu0 %v108
    %1063 = vmatpush.msra.mxu0 %v107
    %1064 = vmatpush.msra.mxu0 %v106
    %1065 = vmatmul.f32.gmra.mxu0 %v1038
    %v1066 = vpop.f32.mrf.mxu0
    %v1067 = vadd.f32 %v1034, %v1066
    %1068 = vmatmul.f32.gmra.mxu0 %v1041
    %v1069 = vpop.f32.mrf.mxu0
    %v1070 = vadd.f32 %v1034, %v1069
    %1071 = vmatmul.f32.gmra.mxu0 %v1044
    %v1072 = vpop.f32.mrf.mxu0
    %v1073 = vadd.f32 %v1034, %v1072
    %1074 = vmatmul.f32.gmra.mxu0 %v1047
    %v1075 = vpop.f32.mrf.mxu0
    %v1076 = vadd.f32 %v1034, %v1075
    %1077 = vdwg.mxu0
    %1079 = vrot.lane.b32.xlu0 %v1070, 32
    %v1080 = vpop.permute.xlu0 %1079
    %1083 = vrot.lane.b32.xlu0 %v1073, 64
    %v1084 = vpop.permute.xlu0 %1083
    %1087 = vrot.lane.b32.xlu0 %v1076, 96
    %v1088 = vpop.permute.xlu0 %1087
    %vm1090 = vcmask 261120
    %v1091 = vsel %vm1090, %v1067, %v1080
    %vm1092 = vcmask 523264
    %v1093 = vsel %vm1092, %v1091, %v1084
    %vm1094 = vcmask 785408
    %v1095 = vsel %vm1094, %v1093, %v1088
    %1096 = vst [vmem:[#allocation2] sm:$0xff] %v1095
    // Predicated region
    $region30: #{tpu_custom_call.1} parent=1 // pred_check
      _
    $region31: #{tpu_custom_call.1} parent=1 // pred_check_branch
      %1098 = sbr.rel (0) target = $region33
    $region32: #{tpu_custom_call.1} parent=1 // pred_region
      %1100 = vsyncadd [#allocation3], 0
      %s1102 = sshll.u32 [#allocation2], 4
      %s1103 = int_to_ptr.vmem [resolvable:$true] %s1102
      %s1104 = sshll.u32 %s7, 4
      %s1105 = int_to_ptr.hbm [resolvable:$true] %s1104
      %1107 = dma.vmem_to_hbm [thread:$0]  %s1103, 128, %s1105, [#allocation3]
    $region33: #{tpu_custom_call.1} parent=1 // pred_fallthru
      _
    // Predicated region
    $region34: #{tpu_custom_call.1} parent=1 // pred_check
      _
    $region35: #{tpu_custom_call.1} parent=1 // pred_check_branch
      %1109 = sbr.rel (0) target = $region37
    $region36: #{tpu_custom_call.1} parent=1 // pred_region
      %1111 = dma.done [#allocation3], 128
    $region37: #{tpu_custom_call.1} parent=1 // pred_fallthru
      _
    %1112 = vsyncpa [#allocation3], 1

</llo_original>
